<compile_context>
chip_gen: v5e
topology: v5e:2x2
jax: 0.10.0
libtpu: 0.0.40
codegen_flags: <defaults>
</compile_context>

<pallas_src>
import functools
import math

import jax
import jax.numpy as jnp
from jax import lax
from jax.experimental import pallas as pl
from jax.experimental.pallas import tpu as pltpu


def _msa_kernel(x_q_ref, x_kv_ref, wq_ref, bq_ref, wkv_ref, bkv_ref, o_ref,
                kv_scratch, *, n_heads, d_head, compute_dtype):
    # x_q_ref : (1, tq, D)   query-row tile of x (compute dtype)
    # x_kv_ref: (1, S,  D)   full sequence of x for K/V (compute dtype)
    # wq_ref  : (D, D)       block-diagonal Wq (scale folded in), compute dtype
    # bq_ref  : (1, D)       bq * scale, f32
    # wkv_ref : (D, 2*D)     block-diagonal [Wk | Wv], compute dtype
    # bkv_ref : (1, 2*D)     [bk | bv], f32
    # o_ref   : (1, tq, D)   lane-dense output row tile
    # kv_scratch: (S, 2*D)   persistent K/V for the current batch element
    dh = d_head
    D = n_heads * dh
    approx = compute_dtype != jnp.float32
    qi = pl.program_id(1)

    # K/V projection for the whole sequence: done once per batch element
    # (first query tile), reused across all remaining query tiles.
    @pl.when(qi == 0)
    def _():
        kv = jnp.dot(x_kv_ref[0], wkv_ref[...],
                     preferred_element_type=jnp.float32) + bkv_ref[...]   # (S, 2D) f32
        kv_scratch[...] = kv.astype(compute_dtype)

    # Q projection for this row tile only (1/sqrt(dh) already folded into Wq/bq).
    q = (jnp.dot(x_q_ref[0], wq_ref[...],
                 preferred_element_type=jnp.float32)
         + bq_ref[...]).astype(compute_dtype)                             # (tq, D)

    # Per-head attention; small static loop, heads carved with static lane slices.
    for h in range(n_heads):
        hs = slice(h * dh, (h + 1) * dh)
        k_h = kv_scratch[:, hs]                                           # (S, dh)
        v_h = kv_scratch[:, D + h * dh:D + (h + 1) * dh]                  # (S, dh)

        # scores = q_h @ k_h^T, contracting last axes (no explicit transpose).
        scores = lax.dot_general(q[:, hs], k_h,
                                 (((1,), (1,)), ((), ())),
                                 preferred_element_type=jnp.float32)      # (tq, S)

        # Numerically-stable softmax in f32; normalize AFTER the AV matmul.
        m = jnp.max(scores, axis=-1, keepdims=True)
        p = jnp.exp(scores - m)
        denom = jnp.sum(p, axis=-1, keepdims=True)

        out_h = jnp.dot(p.astype(compute_dtype), v_h,
                        preferred_element_type=jnp.float32)               # (tq, dh)
        out_h = out_h * pl.reciprocal(denom, approx=approx)

        # Direct lane-slice store into the lane-dense (1, tq, D) output block.
        o_ref[0, :, hs] = out_h.astype(o_ref.dtype)


def _block_diag(w):
    """(H, d_in, d_out) per-head blocks -> (H*d_in, H*d_out) block-diagonal."""
    H, di, do = w.shape
    eye = jnp.eye(H, dtype=w.dtype)
    return jnp.einsum("hio,hg->higo", w, eye).reshape(H * di, H * do)


def _pick_q_tile(S):
    if S <= 256:
        return S
    for t in (256, 512, 128, 64, 32, 16, 8):
        if S % t == 0:
            return t
    return S


def msa_forward(x, params, n_heads, *, compute_dtype=jnp.bfloat16, q_tile=None):
    """x: (B, S, D) float32. params: stacked per-head nn.Linear weights/biases."""
    B, S, D = x.shape
    assert D % n_heads == 0
    dh = D // n_heads
    tq = q_tile or _pick_q_tile(S)
    assert S % tq == 0
    n_qt = S // tq
    scale = 1.0 / math.sqrt(dh)

    # nn.Linear stores W as (out, in): transpose once, fold the attention scale
    # into Q, and build block-diagonal matrices so the kernel runs dense matmuls.
    wq_bd = _block_diag(jnp.swapaxes(params["wq"], -1, -2) * scale)       # (D, D)
    wk_bd = _block_diag(jnp.swapaxes(params["wk"], -1, -2))
    wv_bd = _block_diag(jnp.swapaxes(params["wv"], -1, -2))
    wkv_bd = jnp.concatenate([wk_bd, wv_bd], axis=-1)                     # (D, 2D)
    bq = (params["bq"] * scale).reshape(1, D).astype(jnp.float32)
    bkv = jnp.concatenate([params["bk"].reshape(1, D),
                           params["bv"].reshape(1, D)], axis=-1).astype(jnp.float32)

    # Pre-cast the big operands once in the wrapper (halves DMA + VMEM on bf16);
    # biases / softmax / accumulation stay f32 inside the kernel.
    x_c = x.astype(compute_dtype)
    wq_bd = wq_bd.astype(compute_dtype)
    wkv_bd = wkv_bd.astype(compute_dtype)

    kernel = functools.partial(_msa_kernel, n_heads=n_heads, d_head=dh,
                               compute_dtype=compute_dtype)

    x_q_spec = pl.BlockSpec((1, tq, D), lambda b, qi: (b, qi, 0))          # Q rows
    x_kv_spec = pl.BlockSpec((1, S, D), lambda b, qi: (b, 0, 0))           # K/V source
    wq_spec = pl.BlockSpec((D, D), lambda b, qi: (0, 0))                   # fetched once
    bq_spec = pl.BlockSpec((1, D), lambda b, qi: (0, 0))
    wkv_spec = pl.BlockSpec((D, 2 * D), lambda b, qi: (0, 0))
    bkv_spec = pl.BlockSpec((1, 2 * D), lambda b, qi: (0, 0))
    o_spec = pl.BlockSpec((1, tq, D), lambda b, qi: (b, qi, 0))            # lane-dense

    itm = jnp.dtype(compute_dtype).itemsize

    # FLOPs as executed: dense block-diag projections (Q over all tiles, K/V once
    # per batch) + per-head QK^T and AV.
    flops = 2 * B * S * D * 3 * D + 4 * B * S * S * D
    transcendentals = B * n_heads * S * S
    bytes_accessed = 2 * B * S * D * itm + 3 * D * D * itm + 3 * D * 4 + B * S * D * 4
    cost = pl.CostEstimate(flops=flops, transcendentals=transcendentals,
                           bytes_accessed=bytes_accessed)

    # Per-step VMEM footprint: double-buffered input/output blocks + persistent
    # K/V scratch + one head's sequential score/exp temporaries (not H-scaled).
    vmem_est = (2 * (S * D + tq * D) * itm          # x blocks (kv view + q view), 2 bufs
                + 2 * tq * D * 4                    # output block, 2 bufs
                + 2 * 3 * D * D * itm + 2 * 3 * D * 4   # weights / biases, 2 bufs
                + S * 2 * D * itm                   # persistent K/V scratch
                + 2 * tq * S * 4                    # scores + exp (one head live)
                + 4 * tq * D * 4)                   # q / per-head outputs / temps
    vmem_limit = None
    if vmem_est > 16 * 2 ** 20:                     # lowest scoped default (v5e)
        try:
            vmem_cap = int(pltpu.get_tpu_info().vmem_capacity_bytes)
        except Exception:
            vmem_cap = 64 * 2 ** 20                 # v7x physical floor
        vmem_limit = min(int(vmem_est * 1.25), int(vmem_cap * 0.9))

    return pl.pallas_call(
        kernel,
        out_shape=jax.ShapeDtypeStruct((B, S, D), x.dtype),
        grid_spec=pltpu.PrefetchScalarGridSpec(
            num_scalar_prefetch=0,
            grid=(B, n_qt),
            in_specs=[x_q_spec, x_kv_spec, wq_spec, bq_spec, wkv_spec, bkv_spec],
            out_specs=o_spec,
            scratch_shapes=[pltpu.VMEM((S, 2 * D), compute_dtype)],
        ),
        compiler_params=pltpu.CompilerParams(
            # qi must be "arbitrary": the K/V scratch is reused across q tiles.
            dimension_semantics=("parallel", "arbitrary"),
            vmem_limit_bytes=vmem_limit,
        ),
        cost_estimate=cost,
    )(x_c, x_c, wq_bd, bq, wkv_bd, bkv)


def init_msa_params(key, d, n_heads):
    dh = d // n_heads
    keys = jax.random.split(key, 6)
    bound = 1.0 / math.sqrt(dh)  # matches nn.Linear default init range

    def u(k, shape):
        return jax.random.uniform(k, shape, jnp.float32, -bound, bound)

    return {
        "wq": u(keys[0], (n_heads, dh, dh)),
        "bq": u(keys[1], (n_heads, dh)),
        "wk": u(keys[2], (n_heads, dh, dh)),
        "bk": u(keys[3], (n_heads, dh)),
        "wv": u(keys[4], (n_heads, dh, dh)),
        "bv": u(keys[5], (n_heads, dh)),
    }


def msa_reference(x, params, n_heads):
    """Pure-JAX reference mirroring the PyTorch loops."""
    B, S, D = x.shape
    dh = D // n_heads
    outs = []
    for b in range(B):
        head_outs = []
        for h in range(n_heads):
            xs = x[b, :, h * dh:(h + 1) * dh]
            q = xs @ params["wq"][h].T + params["bq"][h]
            k = xs @ params["wk"][h].T + params["bk"][h]
            v = xs @ params["wv"][h].T + params["bv"][h]
            a = jax.nn.softmax(q @ k.T / math.sqrt(dh), axis=-1)
            head_outs.append(a @ v)
        outs.append(jnp.concatenate(head_outs, axis=-1))
    return jnp.stack(outs)


if __name__ == "__main__":
    B, S, D, H = 2, 8, 32, 2
    key = jax.random.PRNGKey(0)
    k_x, k_p = jax.random.split(key)
    x = jax.random.normal(k_x, (B, S, D), dtype=jnp.float32)
    params = init_msa_params(k_p, D, H)

    ref = msa_reference(x, params, H)

    # f32 compute path: tight check against the pure-JAX reference.
    out_f32 = jax.block_until_ready(
        msa_forward(x, params, H, compute_dtype=jnp.float32))
    assert out_f32.shape == (B, S, D)
    assert jnp.allclose(out_f32, ref, atol=1e-4, rtol=1e-4), "f32 mismatch vs reference"

    # bf16 MXU path (default): looser tolerance (bf16 matmuls + approx reciprocal,
    # so softmax rows don't sum to exactly 1).
    out_bf16 = jax.block_until_ready(msa_forward(x, params, H))
    assert out_bf16.shape == (B, S, D)
    assert jnp.allclose(out_bf16, ref, atol=2e-2, rtol=2e-2), "bf16 mismatch vs reference"

    print("KERNEL_OK")
</pallas_src>

<mosaic_0001>
module attributes {stable_mosaic.version = 11 : i64} {
  func.func @_msa_kernel(%arg0: i32, %arg1: i32, %arg2: memref<1x8x32xf32, #tpu.memory_space<vmem>>, %arg3: memref<1x8x32xf32, #tpu.memory_space<vmem>>, %arg4: memref<32x32xf32, #tpu.memory_space<vmem>>, %arg5: memref<1x32xf32, #tpu.memory_space<vmem>>, %arg6: memref<32x64xf32, #tpu.memory_space<vmem>>, %arg7: memref<1x64xf32, #tpu.memory_space<vmem>>, %arg8: memref<1x8x32xf32, #tpu.memory_space<vmem>>, %arg9: memref<8x64xf32, #tpu.memory_space<vmem>>) attributes {dimension_semantics = [#tpu.dimension_semantics<parallel>, #tpu.dimension_semantics<arbitrary>], iteration_bounds = array<i64: 2, 1>, scalar_prefetch = 0 : i64, scratch_operands = 1 : i64, tpu.core_type = #tpu.core_type<tc>, window_params = [{transform_indices = @transform_0, window_bounds = array<i64: 1, 8, 32>}, {transform_indices = @transform_1, window_bounds = array<i64: 1, 8, 32>}, {pipeline_mode = #tpu.pipeline_mode<synchronous>, transform_indices = @transform_2, window_bounds = array<i64: 32, 32>}, {pipeline_mode = #tpu.pipeline_mode<synchronous>, transform_indices = @transform_3, window_bounds = array<i64: 1, 32>}, {pipeline_mode = #tpu.pipeline_mode<synchronous>, transform_indices = @transform_4, window_bounds = array<i64: 32, 64>}, {pipeline_mode = #tpu.pipeline_mode<synchronous>, transform_indices = @transform_5, window_bounds = array<i64: 1, 64>}, {transform_indices = @transform_6, window_bounds = array<i64: 1, 8, 32>}]} {
    %c0_i32 = arith.constant 0 : i32
    %0 = arith.cmpi eq, %arg1, %c0_i32 : i32
    %1 = arith.extui %0 : i1 to i32
    %c0_i32_0 = arith.constant 0 : i32
    %2 = arith.cmpi ne, %1, %c0_i32_0 : i32
    scf.if %2 {
      %c0_26 = arith.constant 0 : index
      %c0_27 = arith.constant 0 : index
      %c0_28 = arith.constant 0 : index
      %46 = vector.load %arg3[%c0_26, %c0_27, %c0_28] : memref<1x8x32xf32, #tpu.memory_space<vmem>>, vector<1x8x32xf32>
      %47 = vector.shape_cast %46 : vector<1x8x32xf32> to vector<8x32xf32>
      %c0_29 = arith.constant 0 : index
      %c0_30 = arith.constant 0 : index
      %48 = vector.load %arg6[%c0_29, %c0_30] : memref<32x64xf32, #tpu.memory_space<vmem>>, vector<32x64xf32>
      %cst_31 = arith.constant dense<0.000000e+00> : vector<8x64xf32>
      %49 = tpu.matmul %47, %48, %cst_31 {dimension_numbers = #tpu.dot_dimension_numbers<[1], [0], [0], [1], [0, 0, 1, 1], [], []>} : vector<8x32xf32>, vector<32x64xf32>, vector<8x64xf32> -> vector<8x64xf32>
      %c0_32 = arith.constant 0 : index
      %c0_33 = arith.constant 0 : index
      %50 = vector.load %arg7[%c0_32, %c0_33] : memref<1x64xf32, #tpu.memory_space<vmem>>, vector<1x64xf32>
      %51 = vector.broadcast %50 : vector<1x64xf32> to vector<8x64xf32>
      %52 = arith.addf %49, %51 : vector<8x64xf32>
      %c0_34 = arith.constant 0 : index
      %c0_35 = arith.constant 0 : index
      %53 = vector.load %arg9[%c0_34, %c0_35] : memref<8x64xf32, #tpu.memory_space<vmem>>, vector<8x64xf32>
      tpu.vector_store %arg9[%c0_34, %c0_35], %52 {strides = array<i32>} : memref<8x64xf32, #tpu.memory_space<vmem>>, vector<8x64xf32>,
    } else {
    }
    %c0 = arith.constant 0 : index
    %c0_1 = arith.constant 0 : index
    %c0_2 = arith.constant 0 : index
    %3 = vector.load %arg2[%c0, %c0_1, %c0_2] : memref<1x8x32xf32, #tpu.memory_space<vmem>>, vector<1x8x32xf32>
    %4 = vector.shape_cast %3 : vector<1x8x32xf32> to vector<8x32xf32>
    %c0_3 = arith.constant 0 : index
    %c0_4 = arith.constant 0 : index
    %5 = vector.load %arg4[%c0_3, %c0_4] : memref<32x32xf32, #tpu.memory_space<vmem>>, vector<32x32xf32>
    %cst = arith.constant dense<0.000000e+00> : vector<8x32xf32>
    %6 = tpu.matmul %4, %5, %cst {dimension_numbers = #tpu.dot_dimension_numbers<[1], [0], [0], [1], [0, 0, 1, 1], [], []>} : vector<8x32xf32>, vector<32x32xf32>, vector<8x32xf32> -> vector<8x32xf32>
    %c0_5 = arith.constant 0 : index
    %c0_6 = arith.constant 0 : index
    %7 = vector.load %arg5[%c0_5, %c0_6] : memref<1x32xf32, #tpu.memory_space<vmem>>, vector<1x32xf32>
    %8 = vector.broadcast %7 : vector<1x32xf32> to vector<8x32xf32>
    %9 = arith.addf %6, %8 : vector<8x32xf32>
    %c0_7 = arith.constant 0 : index
    %c0_8 = arith.constant 0 : index
    %10 = vector.load %arg9[%c0_7, %c0_8] : memref<8x64xf32, #tpu.memory_space<vmem>>, vector<8x16xf32>
    %c0_9 = arith.constant 0 : index
    %c32 = arith.constant 32 : index
    %11 = vector.load %arg9[%c0_9, %c32] : memref<8x64xf32, #tpu.memory_space<vmem>>, vector<8x16xf32>
    %12 = vector.extract_strided_slice %9 {offsets = [0, 0], sizes = [8, 16], strides = [1, 1]} : vector<8x32xf32> to vector<8x16xf32>
    %cst_10 = arith.constant dense<0.000000e+00> : vector<8x8xf32>
    %13 = tpu.matmul %12, %10, %cst_10 {dimension_numbers = #tpu.dot_dimension_numbers<[1], [1], [0], [0], [0, 0, 1, 0], [], []>} : vector<8x16xf32>, vector<8x16xf32>, vector<8x8xf32> -> vector<8x8xf32>
    %cst_11 = arith.constant dense<0xFF800000> : vector<8xf32>
    %14 = vector.multi_reduction <maximumf>, %13, %cst_11 [1] : vector<8x8xf32> to vector<8xf32>
    %15 = vector.shape_cast %14 : vector<8xf32> to vector<8x1xf32>
    %16 = vector.broadcast %15 : vector<8x1xf32> to vector<8x8xf32>
    %17 = arith.subf %13, %16 : vector<8x8xf32>
    %18 = math.exp %17 : vector<8x8xf32>
    %cst_12 = arith.constant dense<0.000000e+00> : vector<8xf32>
    %19 = vector.multi_reduction <add>, %18, %cst_12 [1] : vector<8x8xf32> to vector<8xf32>
    %20 = vector.shape_cast %19 : vector<8xf32> to vector<8x1xf32>
    %cst_13 = arith.constant dense<0.000000e+00> : vector<8x16xf32>
    %21 = tpu.matmul %18, %11, %cst_13 {dimension_numbers = #tpu.dot_dimension_numbers<[1], [0], [0], [1], [0, 0, 1, 1], [], []>} : vector<8x8xf32>, vector<8x16xf32>, vector<8x16xf32> -> vector<8x16xf32>
    %22 = tpu.reciprocal %20 : vector<8x1xf32> -> vector<8x1xf32>
    %23 = vector.broadcast %22 : vector<8x1xf32> to vector<8x16xf32>
    %24 = arith.mulf %21, %23 : vector<8x16xf32>
    %c0_14 = arith.constant 0 : index
    %c0_15 = arith.constant 0 : index
    %c0_16 = arith.constant 0 : index
    %25 = vector.load %arg8[%c0_14, %c0_15, %c0_16] : memref<1x8x32xf32, #tpu.memory_space<vmem>>, vector<1x8x16xf32>
    %26 = vector.shape_cast %25 : vector<1x8x16xf32> to vector<8x16xf32>
    %27 = vector.shape_cast %24 : vector<8x16xf32> to vector<1x8x16xf32>
    tpu.vector_store %arg8[%c0_14, %c0_15, %c0_16], %27 {strides = array<i32>} : memref<1x8x32xf32, #tpu.memory_space<vmem>>, vector<1x8x16xf32>,
    %c0_17 = arith.constant 0 : index
    %c16 = arith.constant 16 : index
    %28 = vector.load %arg9[%c0_17, %c16] : memref<8x64xf32, #tpu.memory_space<vmem>>, vector<8x16xf32>
    %c0_18 = arith.constant 0 : index
    %c48 = arith.constant 48 : index
    %29 = vector.load %arg9[%c0_18, %c48] : memref<8x64xf32, #tpu.memory_space<vmem>>, vector<8x16xf32>
    %30 = vector.extract_strided_slice %9 {offsets = [0, 16], sizes = [8, 16], strides = [1, 1]} : vector<8x32xf32> to vector<8x16xf32>
    %cst_19 = arith.constant dense<0.000000e+00> : vector<8x8xf32>
    %31 = tpu.matmul %30, %28, %cst_19 {dimension_numbers = #tpu.dot_dimension_numbers<[1], [1], [0], [0], [0, 0, 1, 0], [], []>} : vector<8x16xf32>, vector<8x16xf32>, vector<8x8xf32> -> vector<8x8xf32>
    %cst_20 = arith.constant dense<0xFF800000> : vector<8xf32>
    %32 = vector.multi_reduction <maximumf>, %31, %cst_20 [1] : vector<8x8xf32> to vector<8xf32>
    %33 = vector.shape_cast %32 : vector<8xf32> to vector<8x1xf32>
    %34 = vector.broadcast %33 : vector<8x1xf32> to vector<8x8xf32>
    %35 = arith.subf %31, %34 : vector<8x8xf32>
    %36 = math.exp %35 : vector<8x8xf32>
    %cst_21 = arith.constant dense<0.000000e+00> : vector<8xf32>
    %37 = vector.multi_reduction <add>, %36, %cst_21 [1] : vector<8x8xf32> to vector<8xf32>
    %38 = vector.shape_cast %37 : vector<8xf32> to vector<8x1xf32>
    %cst_22 = arith.constant dense<0.000000e+00> : vector<8x16xf32>
    %39 = tpu.matmul %36, %29, %cst_22 {dimension_numbers = #tpu.dot_dimension_numbers<[1], [0], [0], [1], [0, 0, 1, 1], [], []>} : vector<8x8xf32>, vector<8x16xf32>, vector<8x16xf32> -> vector<8x16xf32>
    %40 = tpu.reciprocal %38 : vector<8x1xf32> -> vector<8x1xf32>
    %41 = vector.broadcast %40 : vector<8x1xf32> to vector<8x16xf32>
    %42 = arith.mulf %39, %41 : vector<8x16xf32>
    %c0_23 = arith.constant 0 : index
    %c0_24 = arith.constant 0 : index
    %c16_25 = arith.constant 16 : index
    %43 = vector.load %arg8[%c0_23, %c0_24, %c16_25] : memref<1x8x32xf32, #tpu.memory_space<vmem>>, vector<1x8x16xf32>
    %44 = vector.shape_cast %43 : vector<1x8x16xf32> to vector<8x16xf32>
    %45 = vector.shape_cast %42 : vector<8x16xf32> to vector<1x8x16xf32>
    tpu.vector_store %arg8[%c0_23, %c0_24, %c16_25], %45 {strides = array<i32>} : memref<1x8x32xf32, #tpu.memory_space<vmem>>, vector<1x8x16xf32>,
    return
  }
  func.func @transform_0(%arg0: i32, %arg1: i32) -> (i32, i32, i32) {
    %c0_i32 = arith.constant 0 : i32
    %c0_i32_0 = arith.constant 0 : i32
    return %arg0, %arg1, %c0_i32 : i32, i32, i32
  }
  func.func @transform_1(%arg0: i32, %arg1: i32) -> (i32, i32, i32) {
    %c0_i32 = arith.constant 0 : i32
    %c0_i32_0 = arith.constant 0 : i32
    %c0_i32_1 = arith.constant 0 : i32
    return %arg0, %c0_i32, %c0_i32_0 : i32, i32, i32
  }
  func.func @transform_2(%arg0: i32, %arg1: i32) -> (i32, i32) {
    %c0_i32 = arith.constant 0 : i32
    %c0_i32_0 = arith.constant 0 : i32
    %c0_i32_1 = arith.constant 0 : i32
    return %c0_i32, %c0_i32_0 : i32, i32
  }
  func.func @transform_3(%arg0: i32, %arg1: i32) -> (i32, i32) {
    %c0_i32 = arith.constant 0 : i32
    %c0_i32_0 = arith.constant 0 : i32
    %c0_i32_1 = arith.constant 0 : i32
    return %c0_i32, %c0_i32_0 : i32, i32
  }
  func.func @transform_4(%arg0: i32, %arg1: i32) -> (i32, i32) {
    %c0_i32 = arith.constant 0 : i32
    %c0_i32_0 = arith.constant 0 : i32
    %c0_i32_1 = arith.constant 0 : i32
    return %c0_i32, %c0_i32_0 : i32, i32
  }
  func.func @transform_5(%arg0: i32, %arg1: i32) -> (i32, i32) {
    %c0_i32 = arith.constant 0 : i32
    %c0_i32_0 = arith.constant 0 : i32
    %c0_i32_1 = arith.constant 0 : i32
    return %c0_i32, %c0_i32_0 : i32, i32
  }
  func.func @transform_6(%arg0: i32, %arg1: i32) -> (i32, i32, i32) {
    %c0_i32 = arith.constant 0 : i32
    %c0_i32_0 = arith.constant 0 : i32
    return %arg0, %arg1, %c0_i32 : i32, i32, i32
  }
}

</mosaic_0001>

<llo_original>
// kernel: tpu_custom_call.1
$region0: #{tpu_custom_call.1}
  #allocation0 [shape = 'u32[]', space=smem, size = 0x4, offset = 0x4, fixed_abs, tag = 'smem constant byte address 0x4 - core index']
  #allocation1 [shape = 'u32[72,128]{1,0:T(1,128)}', space=vmem, size = 0x9000, scoped, tag = 'internal scratch']
  #allocation2 [shape = 'f32[8,64]{1,0:T(8,128)}', space=vmem, size = 0x1000, scoped, tag = 'scratch operand']
  %s0 = inlined_call_operand.hbm [shape: f32[2,8,32], index: 0, kind: input, shape index: {}]
  %s1 = inlined_call_operand.hbm [shape: f32[2,8,32], index: 1, kind: input, shape index: {}]
  %s2 = inlined_call_operand.hbm [shape: f32[32,32], index: 2, kind: input, shape index: {}]
  %s3 = inlined_call_operand.vmem [shape: f32[1,32], index: 3, kind: input, shape index: {}]
  %s4 = inlined_call_operand.hbm [shape: f32[32,64], index: 4, kind: input, shape index: {}]
  %s5 = inlined_call_operand.vmem [shape: f32[1,64], index: 5, kind: input, shape index: {}]
  %s6 = inlined_call_operand.hbm [shape: f32[2,8,32], index: 6, kind: output, shape index: {}]
  %s7 = sld [smem:[#allocation0]]
  $region77: #{tpu_custom_call.1} parent=0
    _
  %s9 = ssub.s32 1, %s7
  %s10 = scalar_select 0, %s9, %s7
  $region1: #{tpu_custom_call.1} parent=0
    #allocation3 [shape = 'u8[8192]{0}', space=vmem, size = 0x2000, scoped, tag = 'input window, operand 0']
    #allocation4 [shape = 's32[2]{0}', space=sflag, size = 0x8, scoped, tag = 'scoped memory for tpu_custom_call.1']
    #allocation5 [shape = 's32[2]{0}', space=sflag, size = 0x8, scoped, tag = 'scoped memory for tpu_custom_call.1']
    #allocation6 [shape = 'u8[8192]{0}', space=vmem, size = 0x2000, scoped, tag = 'input window, operand 1']
    #allocation7 [shape = 's32[2]{0}', space=sflag, size = 0x8, scoped, tag = 'scoped memory for tpu_custom_call.1']
    #allocation8 [shape = 'u8[16384]{0}', space=vmem, size = 0x4000, scoped, tag = 'input window, operand 2, single buffered']
    #allocation9 [shape = 'u8[16384]{0}', space=vmem, size = 0x4000, scoped, tag = 'input window, operand 4, single buffered']
    #allocation10 [shape = 's32[1]{0}', space=sflag, size = 0x4, scoped, tag = 'scoped memory for tpu_custom_call.1']
    #allocation11 [shape = 'u8[8192]{0}', space=vmem, size = 0x2000, scoped, tag = 'output window, operand 0']
    %11 = vsyncpa [#allocation4], 0
    %s12 = scalar_lea.sflag [#allocation4], 1
    %13 = vsyncpa %s12, 0
    %14 = vsyncpa [#allocation7], 0
    %s15 = scalar_lea.sflag [#allocation7], 1
    %16 = vsyncpa %s15, 0
    %17 = vsyncpa [#allocation10], 0
    %18 = vsyncpa [#allocation5], 0
    %s19 = scalar_lea.sflag [#allocation5], 1
    %20 = vsyncpa %s19, 0
    loop: start=0, step=1, limit=4
    $region2: #{tpu_custom_call.1} parent=1 // loop_pre_header
      _
    $region3: #{tpu_custom_call.1} parent=1 // loop_header
      %s22 = sphi 0, %s26
      %p23 = scmp.ge.s32.totalorder %s22, 4
      %s29 = sphi 0, %s41
      %s30 = sphi 0, %s37
      %s31 = sphi 0, %s29
      %s32 = sphi 0, %s30
      %s33 = sphi 0, %s31
      %s34 = sphi 0, %s32
      %s46 = sphi 0, %s48
      %s49 = sphi 0, %s46
      %s50 = sphi 0, %s49
      %s66 = sphi 0, %s50
      %s72 = sphi 0, %s74
      %s75 = sphi 0, %s72
      %s76 = sphi 0, %s75
      %s92 = sphi 0, %s76
      %s96 = sphi 0, %s96
      %s98 = sphi 0, %s96
      %s99 = sphi 0, %s98
      %s113 = sphi 0, %s99
      %s117 = sphi 0, %s117
      %s119 = sphi 0, %s117
      %s120 = sphi 0, %s119
      %s134 = sphi 0, %s120
      %s138 = sphi 0, %s138
      %s140 = sphi 0, %s138
      %s141 = sphi 0, %s140
      %s155 = sphi 0, %s141
      %s159 = sphi 0, %s159
      %s161 = sphi 0, %s159
      %s162 = sphi 0, %s161
      %s176 = sphi 0, %s162
      %s184 = sphi 0, %s186
      %s187 = sphi 0, %s184
      %s188 = sphi 0, %s187
      %s204 = sphi 0, %s188
    $region4: #{tpu_custom_call.1} parent=1 // loop_header_branch
      %25 = sbr.rel (%p23) target = $region8
    $region5: #{tpu_custom_call.1} parent=1 // loop_body
      %s27 = ssub.s32 %s22, 1
      %s28 = ssub.s32 %s22, 2
      %s35 = sadd.s32 1, %s30
      %p36 = scmp.ge.s32.totalorder %s35, 1
      %s37 = scalar_select %p36, 0, %s35
      %s38 = sadd.s32 1, %s29
      %s39 = scalar_select %p36, %s38, %s29
      %p40 = scmp.ge.s32.totalorder %s39, 2
      %s41 = scalar_select %p40, 0, %s39
      %s42 = ssub.s32 %s29, %s41
      %s43 = ssub.s32 %s30, %s37
      %s44 = sor.u32 %s42, %s43
      %p45 = scmp.eq.s32.totalorder %s44, 0
      %s47 = sadd.s32 %s46, 1
      %s48 = scalar_select %p45, %s46, %s47
      %p51 = pneg %p45
      %p52 = scmp.eq.s32.totalorder %s22, 1
      %p53 = por %p51, %p52
      %p54 = scmp.ne.s32.totalorder %s46, %s49
      %p55 = scmp.eq.s32.totalorder %s22, 0
      %p56 = por %p54, %p55
      %p57 = scmp.ne.s32.totalorder %s46, %s49
      %p58 = scmp.eq.s32.totalorder %s27, 1
      %p59 = por %p57, %p58
      %p60 = scmp.ne.s32.totalorder %s49, %s50
      %p61 = scmp.eq.s32.totalorder %s27, 0
      %p62 = por %p60, %p61
      %p63 = scmp.ne.s32.totalorder %s49, %s50
      %p64 = scmp.eq.s32.totalorder %s28, 1
      %p65 = por %p63, %p64
      %p67 = scmp.ne.s32.totalorder %s50, %s66
      %p68 = scmp.eq.s32.totalorder %s28, 0
      %p69 = por %p67, %p68
      %s70 = ssub.s32 %s29, %s41
      %p71 = scmp.eq.s32.totalorder %s70, 0
      %s73 = sadd.s32 %s72, 1
      %s74 = scalar_select %p71, %s72, %s73
      %p77 = pneg %p71
      %p78 = scmp.eq.s32.totalorder %s22, 1
      %p79 = por %p77, %p78
      %p80 = scmp.ne.s32.totalorder %s72, %s75
      %p81 = scmp.eq.s32.totalorder %s22, 0
      %p82 = por %p80, %p81
      %p83 = scmp.ne.s32.totalorder %s72, %s75
      %p84 = scmp.eq.s32.totalorder %s27, 1
      %p85 = por %p83, %p84
      %p86 = scmp.ne.s32.totalorder %s75, %s76
      %p87 = scmp.eq.s32.totalorder %s27, 0
      %p88 = por %p86, %p87
      %p89 = scmp.ne.s32.totalorder %s75, %s76
      %p90 = scmp.eq.s32.totalorder %s28, 1
      %p91 = por %p89, %p90
      %p93 = scmp.ne.s32.totalorder %s76, %s92
      %p94 = scmp.eq.s32.totalorder %s28, 0
      %p95 = por %p93, %p94
      %s97 = sadd.s32 %s96, 1
      %p100 = scmp.eq.s32.totalorder %s22, 1
      %p101 = scmp.ne.s32.totalorder %s96, %s98
      %p102 = scmp.eq.s32.totalorder %s22, 0
      %p103 = por %p101, %p102
      %p104 = scmp.ne.s32.totalorder %s96, %s98
      %p105 = scmp.eq.s32.totalorder %s27, 1
      %p106 = por %p104, %p105
      %p107 = scmp.ne.s32.totalorder %s98, %s99
      %p108 = scmp.eq.s32.totalorder %s27, 0
      %p109 = por %p107, %p108
      %p110 = scmp.ne.s32.totalorder %s98, %s99
      %p111 = scmp.eq.s32.totalorder %s28, 1
      %p112 = por %p110, %p111
      %p114 = scmp.ne.s32.totalorder %s99, %s113
      %p115 = scmp.eq.s32.totalorder %s28, 0
      %p116 = por %p114, %p115
      %s118 = sadd.s32 %s117, 1
      %p121 = scmp.eq.s32.totalorder %s22, 1
      %p122 = scmp.ne.s32.totalorder %s117, %s119
      %p123 = scmp.eq.s32.totalorder %s22, 0
      %p124 = por %p122, %p123
      %p125 = scmp.ne.s32.totalorder %s117, %s119
      %p126 = scmp.eq.s32.totalorder %s27, 1
      %p127 = por %p125, %p126
      %p128 = scmp.ne.s32.totalorder %s119, %s120
      %p129 = scmp.eq.s32.totalorder %s27, 0
      %p130 = por %p128, %p129
      %p131 = scmp.ne.s32.totalorder %s119, %s120
      %p132 = scmp.eq.s32.totalorder %s28, 1
      %p133 = por %p131, %p132
      %p135 = scmp.ne.s32.totalorder %s120, %s134
      %p136 = scmp.eq.s32.totalorder %s28, 0
      %p137 = por %p135, %p136
      %s139 = sadd.s32 %s138, 1
      %p142 = scmp.eq.s32.totalorder %s22, 1
      %p143 = scmp.ne.s32.totalorder %s138, %s140
      %p144 = scmp.eq.s32.totalorder %s22, 0
      %p145 = por %p143, %p144
      %p146 = scmp.ne.s32.totalorder %s138, %s140
      %p147 = scmp.eq.s32.totalorder %s27, 1
      %p148 = por %p146, %p147
      %p149 = scmp.ne.s32.totalorder %s140, %s141
      %p150 = scmp.eq.s32.totalorder %s27, 0
      %p151 = por %p149, %p150
      %p152 = scmp.ne.s32.totalorder %s140, %s141
      %p153 = scmp.eq.s32.totalorder %s28, 1
      %p154 = por %p152, %p153
      %p156 = scmp.ne.s32.totalorder %s141, %s155
      %p157 = scmp.eq.s32.totalorder %s28, 0
      %p158 = por %p156, %p157
      %s160 = sadd.s32 %s159, 1
      %p163 = scmp.eq.s32.totalorder %s22, 1
      %p164 = scmp.ne.s32.totalorder %s159, %s161
      %p165 = scmp.eq.s32.totalorder %s22, 0
      %p166 = por %p164, %p165
      %p167 = scmp.ne.s32.totalorder %s159, %s161
      %p168 = scmp.eq.s32.totalorder %s27, 1
      %p169 = por %p167, %p168
      %p170 = scmp.ne.s32.totalorder %s161, %s162
      %p171 = scmp.eq.s32.totalorder %s27, 0
      %p172 = por %p170, %p171
      %p173 = scmp.ne.s32.totalorder %s161, %s162
      %p174 = scmp.eq.s32.totalorder %s28, 1
      %p175 = por %p173, %p174
      %p177 = scmp.ne.s32.totalorder %s162, %s176
      %p178 = scmp.eq.s32.totalorder %s28, 0
      %p179 = por %p177, %p178
      %s180 = ssub.s32 %s29, %s41
      %s181 = ssub.s32 %s30, %s37
      %s182 = sor.u32 %s180, %s181
      %p183 = scmp.eq.s32.totalorder %s182, 0
      %s185 = sadd.s32 %s184, 1
      %s186 = scalar_select %p183, %s184, %s185
      %p189 = pneg %p183
      %p190 = scmp.eq.s32.totalorder %s22, 1
      %p191 = por %p189, %p190
      %p192 = scmp.ne.s32.totalorder %s184, %s187
      %p193 = scmp.eq.s32.totalorder %s22, 0
      %p194 = por %p192, %p193
      %p195 = scmp.ne.s32.totalorder %s184, %s187
      %p196 = scmp.eq.s32.totalorder %s27, 1
      %p197 = por %p195, %p196
      %p198 = scmp.ne.s32.totalorder %s187, %s188
      %p199 = scmp.eq.s32.totalorder %s27, 0
      %p200 = por %p198, %p199
      %p201 = scmp.ne.s32.totalorder %s187, %s188
      %p202 = scmp.eq.s32.totalorder %s28, 1
      %p203 = por %p201, %p202
      %p205 = scmp.ne.s32.totalorder %s188, %s204
      %p206 = scmp.eq.s32.totalorder %s28, 0
      %p207 = por %p205, %p206
      %p208 = scmp.le.s32.totalorder 1, %s22
      %p209 = scmp.lt.s32.totalorder %s22, 3
      %p210 = pnand %p208, %p209
      %p211 = pneg %p210
      // Predicated region
      $region9: #{tpu_custom_call.1} parent=5 // pred_check
        _
      $region10: #{tpu_custom_call.1} parent=5 // pred_check_branch
        %213 = sbr.rel (%p210) target = $region12
      $region11: #{tpu_custom_call.1} parent=5 // pred_region
        %s214 = ssub.s32 %s22, 1
        // Predicated region
        $region13: #{tpu_custom_call.1} parent=11 // pred_check
          %p215 = pneg %p109
        $region14: #{tpu_custom_call.1} parent=11 // pred_check_branch
          %217 = sbr.rel (%p215) target = $region16
        $region15: #{tpu_custom_call.1} parent=11 // pred_region
          %219 = vsyncadd [#allocation7], 0
          %s220 = sshll.u32 %s2, 4
          %s221 = int_to_ptr.hbm [resolvable:$true] %s220
          %s222 = sshll.u32 [#allocation8], 4
          %s223 = int_to_ptr.vmem [resolvable:$true] %s222
          %228 = dma.hbm_to_vmem [thread:$0]  %s221, 512, %s223, [#allocation7], 128, 128, 8
        $region16: #{tpu_custom_call.1} parent=11 // pred_fallthru
          _
        // Predicated region
        $region17: #{tpu_custom_call.1} parent=11 // pred_check
          %p229 = pneg %p130
        $region18: #{tpu_custom_call.1} parent=11 // pred_check_branch
          %231 = sbr.rel (%p229) target = $region20
        $region19: #{tpu_custom_call.1} parent=11 // pred_region
          _
        $region20: #{tpu_custom_call.1} parent=11 // pred_fallthru
          _
        // Predicated region
        $region21: #{tpu_custom_call.1} parent=11 // pred_check
          %p232 = pneg %p151
        $region22: #{tpu_custom_call.1} parent=11 // pred_check_branch
          %234 = sbr.rel (%p232) target = $region24
        $region23: #{tpu_custom_call.1} parent=11 // pred_region
          %236 = vsyncadd [#allocation10], 0
          %s237 = sshll.u32 %s4, 4
          %s238 = int_to_ptr.hbm [resolvable:$true] %s237
          %s239 = sshll.u32 [#allocation9], 4
          %s240 = int_to_ptr.vmem [resolvable:$true] %s239
          %245 = dma.hbm_to_vmem [thread:$0]  %s238, 512, %s240, [#allocation10], 128, 128, 8
        $region24: #{tpu_custom_call.1} parent=11 // pred_fallthru
          _
        // Predicated region
        $region25: #{tpu_custom_call.1} parent=11 // pred_check
          %p246 = pneg %p172
        $region26: #{tpu_custom_call.1} parent=11 // pred_check_branch
          %248 = sbr.rel (%p246) target = $region28
        $region27: #{tpu_custom_call.1} parent=11 // pred_region
          _
        $region28: #{tpu_custom_call.1} parent=11 // pred_fallthru
          _
      $region12: #{tpu_custom_call.1} parent=5 // pred_fallthru
        _
      %p249 = scmp.lt.s32.totalorder %s22, 2
      // Predicated region
      $region29: #{tpu_custom_call.1} parent=5 // pred_check
        %p250 = pneg %p249
      $region30: #{tpu_custom_call.1} parent=5 // pred_check_branch
        %252 = sbr.rel (%p250) target = $region32
      $region31: #{tpu_custom_call.1} parent=5 // pred_region
        // Predicated region
        $region33: #{tpu_custom_call.1} parent=31 // pred_check
          %p253 = pneg %p56
        $region34: #{tpu_custom_call.1} parent=31 // pred_check_branch
          %255 = sbr.rel (%p253) target = $region36
        $region35: #{tpu_custom_call.1} parent=31 // pred_region
          %s256 = sand.u32 %s46, 1
          %s257 = scalar_lea.sflag [#allocation4], %s256
          %s258 = sand.u32 %s46, 1
          %s259 = smul.addr %s258, 8
          %s260 = scalar_lea.vmem [#allocation3], %s259
          %262 = vsyncadd %s257, 0
          %s263 = sadd.s32 %s30, %s29
          %s264 = smul.addr %s263, 8
          %s265 = scalar_lea.hbm %s0, %s264
          %s267 = sshll.u32 %s265, 4
          %s268 = int_to_ptr.hbm [resolvable:$true] %s267
          %s269 = sshll.u32 %s260, 4
          %s270 = int_to_ptr.vmem [resolvable:$true] %s269
          %272 = dma.hbm_to_vmem [thread:$0]  %s268, 128, %s270, %s257
        $region36: #{tpu_custom_call.1} parent=31 // pred_fallthru
          _
        // Predicated region
        $region37: #{tpu_custom_call.1} parent=31 // pred_check
          %p273 = pneg %p82
        $region38: #{tpu_custom_call.1} parent=31 // pred_check_branch
          %275 = sbr.rel (%p273) target = $region40
        $region39: #{tpu_custom_call.1} parent=31 // pred_region
          %s276 = sand.u32 %s22, 1
          %s277 = scalar_lea.sflag [#allocation7], %s276
          %s278 = sand.u32 %s72, 1
          %s279 = smul.addr %s278, 8
          %s280 = scalar_lea.vmem [#allocation6], %s279
          %282 = vsyncadd %s277, 0
          %s283 = smul.addr %s29, 8
          %s284 = scalar_lea.hbm %s1, %s283
          %s286 = sshll.u32 %s284, 4
          %s287 = int_to_ptr.hbm [resolvable:$true] %s286
          %s288 = sshll.u32 %s280, 4
          %s289 = int_to_ptr.vmem [resolvable:$true] %s288
          %291 = dma.hbm_to_vmem [thread:$0]  %s287, 128, %s289, %s277
        $region40: #{tpu_custom_call.1} parent=31 // pred_fallthru
          _
      $region32: #{tpu_custom_call.1} parent=5 // pred_fallthru
        _
      %p292 = scmp.le.s32.totalorder 1, %s22
      %p293 = scmp.lt.s32.totalorder %s22, 3
      %p294 = pnand %p292, %p293
      %p295 = pneg %p294
      // Predicated region
      $region41: #{tpu_custom_call.1} parent=5 // pred_check
        _
      $region42: #{tpu_custom_call.1} parent=5 // pred_check_branch
        %297 = sbr.rel (%p294) target = $region44
      $region43: #{tpu_custom_call.1} parent=5 // pred_region
        %s298 = ssub.s32 %s22, 1
        %s299 = sand.u32 %s49, 1
        %s300 = scalar_lea.sflag [#allocation4], %s299
        %s301 = sand.u32 %s49, 1
        %s302 = smul.addr %s301, 8
        %s303 = scalar_lea.vmem [#allocation3], %s302
        // Predicated region
        $region45: #{tpu_custom_call.1} parent=43 // pred_check
          %p304 = pneg %p62
        $region46: #{tpu_custom_call.1} parent=43 // pred_check_branch
          %306 = sbr.rel (%p304) target = $region48
        $region47: #{tpu_custom_call.1} parent=43 // pred_region
          %308 = dma.done %s300, 128
        $region48: #{tpu_custom_call.1} parent=43 // pred_fallthru
          _
        %s309 = sand.u32 %s27, 1
        %s310 = scalar_lea.sflag [#allocation7], %s309
        %s311 = sand.u32 %s75, 1
        %s312 = smul.addr %s311, 8
        %s313 = scalar_lea.vmem [#allocation6], %s312
        // Predicated region
        $region49: #{tpu_custom_call.1} parent=43 // pred_check
          %p314 = pneg %p88
        $region50: #{tpu_custom_call.1} parent=43 // pred_check_branch
          %316 = sbr.rel (%p314) target = $region52
        $region51: #{tpu_custom_call.1} parent=43 // pred_region
          %318 = dma.done %s310, 128
        $region52: #{tpu_custom_call.1} parent=43 // pred_fallthru
          _
        // Predicated region
        $region53: #{tpu_custom_call.1} parent=43 // pred_check
          %p319 = pneg %p109
        $region54: #{tpu_custom_call.1} parent=43 // pred_check_branch
          %321 = sbr.rel (%p319) target = $region56
        $region55: #{tpu_custom_call.1} parent=43 // pred_region
          %323 = dma.done [#allocation7], 512
        $region56: #{tpu_custom_call.1} parent=43 // pred_fallthru
          _
        // Predicated region
        $region57: #{tpu_custom_call.1} parent=43 // pred_check
          %p324 = pneg %p151
        $region58: #{tpu_custom_call.1} parent=43 // pred_check_branch
          %326 = sbr.rel (%p324) target = $region60
        $region59: #{tpu_custom_call.1} parent=43 // pred_region
          %328 = dma.done [#allocation10], 512
        $region60: #{tpu_custom_call.1} parent=43 // pred_fallthru
          _
        %s329 = sand.u32 %s49, 1
        %s330 = scalar_lea.sflag [#allocation4], %s329
        %s331 = sand.u32 %s49, 1
        %s332 = smul.addr %s331, 8
        %s333 = scalar_lea.vmem [#allocation3], %s332
        %p334 = pneg %p62
        %p335 = pneg %p59
        %s336 = sand.u32 %s27, 1
        %s337 = scalar_lea.sflag [#allocation7], %s336
        %s338 = sand.u32 %s75, 1
        %s339 = smul.addr %s338, 8
        %s340 = scalar_lea.vmem [#allocation6], %s339
        %p341 = pneg %p88
        %p342 = pneg %p85
        %p343 = pneg %p109
        %p344 = pneg %p106
        %p345 = pneg %p130
        %p346 = pneg %p127
        %p347 = pneg %p151
        %p348 = pneg %p148
        %p349 = pneg %p172
        %p350 = pneg %p169
        %p351 = pneg %p200
        %p352 = pneg %p197
        %s353 = sand.u32 %s187, 1
        %s354 = scalar_lea.sflag [#allocation5], %s353
        %s355 = sand.u32 %s187, 1
        %s356 = smul.addr %s355, 8
        %s357 = scalar_lea.vmem [#allocation11], %s356
        %p358 = scmp.eq.s32.totalorder %s32, 0
        // Predicated region
        $region61: #{tpu_custom_call.1} parent=43 // pred_check
          %p359 = pneg %p358
        $region62: #{tpu_custom_call.1} parent=43 // pred_check_branch
          %361 = sbr.rel (%p359) target = $region64
        $region63: #{tpu_custom_call.1} parent=43 // pred_region
          %v362 = vld [vmem:[%s313] sm:$0xff]
          %v363 = vld [vmem:[#allocation9] sm:$0xff]
          %v364 = vld [vmem:[#allocation9 + $0x8] sm:$0xff]
          %v365 = vld [vmem:[#allocation9 + $0x10] sm:$0xff]
          %v366 = vld [vmem:[#allocation9 + $0x18] sm:$0xff]
          %v367 = vld [vmem:[%s5] sm:$0x1]
          %v369 = vperm.slane %v367, 0
          %vm371 = vcmask 261120
          %v373 = vsel %vm371, %v362, 0
          %375 = vmatpush.msra.mxu0 0.0
          %376 = vmatpush.msra.mxu0 0.0
          %377 = vmatpush.msra.mxu0 0.0
          %378 = vmatpush.msra.mxu0 0.0
          %379 = vmatpush.msra.mxu0 0.0
          %380 = vmatpush.msra.mxu0 0.0
          %381 = vmatpush.msra.mxu0 0.0
          %382 = vmatpush.msra.mxu0 0.0
          %383 = vmatpush.msra.mxu0 0.0
          %384 = vmatpush.msra.mxu0 0.0
          %385 = vmatpush.msra.mxu0 0.0
          %386 = vmatpush.msra.mxu0 0.0
          %387 = vmatpush.msra.mxu0 %v366
          %388 = vmatpush.msra.mxu0 %v365
          %389 = vmatpush.msra.mxu0 %v364
          %390 = vmatpush.msra.mxu0 %v363
          %391 = vmatmul.f32.gmra.mxu0 %v373
          %v392 = vpop.f32.mrf.mxu0
          %v393 = vadd.f32 %v369, %v392
          %394 = vdwg.mxu0
          %vm395 = vcmask 523264
          %396 = vst.msk [vmem:[#allocation2] sm:$0xff] %vm395, %v393
        $region64: #{tpu_custom_call.1} parent=43 // pred_fallthru
          _
        %v397 = vld [vmem:[%s303] sm:$0xff]
        %v398 = vld [vmem:[#allocation8] sm:$0xff]
        %v399 = vld [vmem:[#allocation8 + $0x8] sm:$0xff]
        %v400 = vld [vmem:[#allocation8 + $0x10] sm:$0xff]
        %v401 = vld [vmem:[#allocation8 + $0x18] sm:$0xff]
        %v402 = vld [vmem:[%s3] sm:$0x1]
        %v404 = vperm.slane %v402, 0
        %vm406 = vcmask 261120
        %v408 = vsel %vm406, %v397, 0
        %410 = vmatpush.msra.mxu0 0.0
        %411 = vmatpush.msra.mxu0 0.0
        %412 = vmatpush.msra.mxu0 0.0
        %413 = vmatpush.msra.mxu0 0.0
        %414 = vmatpush.msra.mxu0 0.0
        %415 = vmatpush.msra.mxu0 0.0
        %416 = vmatpush.msra.mxu0 0.0
        %417 = vmatpush.msra.mxu0 0.0
        %418 = vmatpush.msra.mxu0 0.0
        %419 = vmatpush.msra.mxu0 0.0
        %420 = vmatpush.msra.mxu0 0.0
        %421 = vmatpush.msra.mxu0 0.0
        %422 = vmatpush.msra.mxu0 %v401
        %423 = vmatpush.msra.mxu0 %v400
        %424 = vmatpush.msra.mxu0 %v399
        %425 = vmatpush.msra.mxu0 %v398
        %426 = vmatmul.f32.gmra.mxu0 %v408
        %v427 = vpop.f32.mrf.mxu0
        %v428 = vadd.f32 %v404, %v427
        %429 = vdwg.mxu0
        %v430 = vld [vmem:[#allocation2] sm:$0xff]
        %vm431 = vcmask 130048
        %v433 = vsel %vm431, %v428, 0
        %v436 = vsel %vm431, %v430, 0
        %438 = vmatpush.xpose.msra.mxu0 0.0
        %439 = vmatpush.xpose.msra.mxu0 0.0
        %440 = vmatpush.xpose.msra.mxu0 0.0
        %441 = vmatpush.xpose.msra.mxu0 0.0
        %442 = vmatpush.xpose.msra.mxu0 0.0
        %443 = vmatpush.xpose.msra.mxu0 0.0
        %444 = vmatpush.xpose.msra.mxu0 0.0
        %445 = vmatpush.xpose.msra.mxu0 0.0
        %446 = vmatpush.xpose.msra.mxu0 0.0
        %447 = vmatpush.xpose.msra.mxu0 0.0
        %448 = vmatpush.xpose.msra.mxu0 0.0
        %449 = vmatpush.xpose.msra.mxu0 0.0
        %450 = vmatpush.xpose.msra.mxu0 0.0
        %451 = vmatpush.xpose.msra.mxu0 0.0
        %452 = vmatpush.xpose.msra.mxu0 0.0
        %453 = vmatpush.xpose.msra.mxu0 %v436
        %454 = vmatmul.f32.gmra.mxu0 %v433
        %v455 = vpop.f32.mrf.mxu0
        %v456 = vadd.f32 0.0, %v455
        %457 = vdwg.mxu0
        %vm458 = vcmask 64512
        %v459 = vsel %vm458, %v456, -inf
        %460 = vmax.xlane.f32.xlu0 %v459
        %v461 = vpop.xlane.xlu0 %460
        %v462 = vsub.f32 %v456, %v461
        %v463 = vmul.f32 %v462, 1.442695
        %v464 = vpow.pop %v463
        %v465 = vsel %vm458, %v464, 0.0
        %466 = vadd.xlane.f32.xlu0 %v465
        %v467 = vpop.xlane.xlu0 %466
        %468 = vrot.lane.b32.xlu0 %v430, 96
        %v469 = vpop.permute.xlu0 %468
        %v472 = vsel %vm458, %v464, 0
        %474 = vmatpush.msra.mxu0 0.0
        %475 = vmatpush.msra.mxu0 0.0
        %476 = vmatpush.msra.mxu0 0.0
        %477 = vmatpush.msra.mxu0 0.0
        %478 = vmatpush.msra.mxu0 0.0
        %479 = vmatpush.msra.mxu0 0.0
        %480 = vmatpush.msra.mxu0 0.0
        %481 = vmatpush.msra.mxu0 0.0
        %482 = vmatpush.msra.mxu0 0.0
        %483 = vmatpush.msra.mxu0 0.0
        %484 = vmatpush.msra.mxu0 0.0
        %485 = vmatpush.msra.mxu0 0.0
        %486 = vmatpush.msra.mxu0 0.0
        %487 = vmatpush.msra.mxu0 0.0
        %488 = vmatpush.msra.mxu0 0.0
        %489 = vmatpush.msra.mxu0 %v469
        %490 = vmatmul.f32.gmra.mxu0 %v472
        %v491 = vpop.f32.mrf.mxu0
        %v492 = vadd.f32 0.0, %v491
        %493 = vdwg.mxu0
        %v494 = vrcp.pop %v467
        %v495 = vmul.f32 %v467, %v494
        %v496 = vsub.f32 1.0, %v495
        %v497 = vmul.f32 %v494, %v496
        %v498 = vadd.f32 %v494, %v497
        %vm499 = vweird.f32 %v467
        %vm500 = vweird.f32 %v494
        %vm501 = vmor %vm499, %vm500
        %v502 = vsel %vm501, %v494, %v498
        %v503 = vand.u32 2147483647, %v467
        %vm504 = vcmp.eq.f32.partialorder %v503, 8.507059e+37
        %v505 = vand.u32 %v467, 2147483648
        %v506 = vor.u32 1.1754944e-38, %v505
        %v507 = vsel %vm504, %v506, %v502
        %v508 = vmul.f32 %v492, %v507
        %509 = vst.msk [vmem:[%s357] sm:$0xff] %vm431, %v508
        %v510 = vld [vmem:[#allocation2] sm:$0xff]
        %511 = vrot.lane.b32.xlu0 %v428, 112
        %v512 = vpop.permute.xlu0 %511
        %514 = vrot.lane.b32.xlu0 %v510, 112
        %v515 = vpop.permute.xlu0 %514
        %v516 = vsel %vm431, %v512, 0
        %v518 = vsel %vm431, %v515, 0
        %520 = vmatpush.xpose.msra.mxu0 0.0
        %521 = vmatpush.xpose.msra.mxu0 0.0
        %522 = vmatpush.xpose.msra.mxu0 0.0
        %523 = vmatpush.xpose.msra.mxu0 0.0
        %524 = vmatpush.xpose.msra.mxu0 0.0
        %525 = vmatpush.xpose.msra.mxu0 0.0
        %526 = vmatpush.xpose.msra.mxu0 0.0
        %527 = vmatpush.xpose.msra.mxu0 0.0
        %528 = vmatpush.xpose.msra.mxu0 0.0
        %529 = vmatpush.xpose.msra.mxu0 0.0
        %530 = vmatpush.xpose.msra.mxu0 0.0
        %531 = vmatpush.xpose.msra.mxu0 0.0
        %532 = vmatpush.xpose.msra.mxu0 0.0
        %533 = vmatpush.xpose.msra.mxu0 0.0
        %534 = vmatpush.xpose.msra.mxu0 0.0
        %535 = vmatpush.xpose.msra.mxu0 %v518
        %536 = vmatmul.f32.gmra.mxu0 %v516
        %v537 = vpop.f32.mrf.mxu0
        %v538 = vadd.f32 0.0, %v537
        %539 = vdwg.mxu0
        %v540 = vsel %vm458, %v538, -inf
        %541 = vmax.xlane.f32.xlu0 %v540
        %v542 = vpop.xlane.xlu0 %541
        %v543 = vsub.f32 %v538, %v542
        %v544 = vmul.f32 %v543, 1.442695
        %v545 = vpow.pop %v544
        %v546 = vsel %vm458, %v545, 0.0
        %547 = vadd.xlane.f32.xlu0 %v546
        %v548 = vpop.xlane.xlu0 %547
        %549 = vrot.lane.b32.xlu0 %v510, 80
        %v550 = vpop.permute.xlu0 %549
        %v553 = vsel %vm458, %v545, 0
        %555 = vmatpush.msra.mxu0 0.0
        %556 = vmatpush.msra.mxu0 0.0
        %557 = vmatpush.msra.mxu0 0.0
        %558 = vmatpush.msra.mxu0 0.0
        %559 = vmatpush.msra.mxu0 0.0
        %560 = vmatpush.msra.mxu0 0.0
        %561 = vmatpush.msra.mxu0 0.0
        %562 = vmatpush.msra.mxu0 0.0
        %563 = vmatpush.msra.mxu0 0.0
        %564 = vmatpush.msra.mxu0 0.0
        %565 = vmatpush.msra.mxu0 0.0
        %566 = vmatpush.msra.mxu0 0.0
        %567 = vmatpush.msra.mxu0 0.0
        %568 = vmatpush.msra.mxu0 0.0
        %569 = vmatpush.msra.mxu0 0.0
        %570 = vmatpush.msra.mxu0 %v550
        %571 = vmatmul.f32.gmra.mxu0 %v553
        %v572 = vpop.f32.mrf.mxu0
        %v573 = vadd.f32 0.0, %v572
        %574 = vdwg.mxu0
        %v575 = vrcp.pop %v548
        %v576 = vmul.f32 %v548, %v575
        %v577 = vsub.f32 1.0, %v576
        %v578 = vmul.f32 %v575, %v577
        %v579 = vadd.f32 %v575, %v578
        %vm580 = vweird.f32 %v548
        %vm581 = vweird.f32 %v575
        %vm582 = vmor %vm580, %vm581
        %v583 = vsel %vm582, %v575, %v579
        %v584 = vand.u32 2147483647, %v548
        %vm585 = vcmp.eq.f32.partialorder %v584, 8.507059e+37
        %v586 = vand.u32 %v548, 2147483648
        %v587 = vor.u32 1.1754944e-38, %v586
        %v588 = vsel %vm585, %v587, %v583
        %v589 = vmul.f32 %v573, %v588
        %591 = vrot.lane.b32.xlu0 %v589, 16
        %v592 = vpop.permute.xlu0 %591
        %vm594 = vcmask 261248
        %595 = vst.msk [vmem:[%s357] sm:$0xff] %vm594, %v592
        %s596 = sand.u32 %s187, 1
        %s597 = scalar_lea.sflag [#allocation5], %s596
        %s598 = sand.u32 %s187, 1
        %s599 = smul.addr %s598, 8
        %s600 = scalar_lea.vmem [#allocation11], %s599
        // Predicated region
        $region65: #{tpu_custom_call.1} parent=43 // pred_check
          %p601 = pneg %p197
        $region66: #{tpu_custom_call.1} parent=43 // pred_check_branch
          %603 = sbr.rel (%p601) target = $region68
        $region67: #{tpu_custom_call.1} parent=43 // pred_region
          %605 = vsyncadd %s597, 0
          %s606 = sadd.s32 %s32, %s31
          %s607 = smul.addr %s606, 8
          %s608 = scalar_lea.hbm %s6, %s607
          %s610 = sshll.u32 %s600, 4
          %s611 = int_to_ptr.vmem [resolvable:$true] %s610
          %s612 = sshll.u32 %s608, 4
          %s613 = int_to_ptr.hbm [resolvable:$true] %s612
          %615 = dma.vmem_to_hbm [thread:$0]  %s611, 128, %s613, %s597
        $region68: #{tpu_custom_call.1} parent=43 // pred_fallthru
          _
      $region44: #{tpu_custom_call.1} parent=5 // pred_fallthru
        _
      %p616 = scmp.le.s32.totalorder 2, %s22
      // Predicated region
      $region69: #{tpu_custom_call.1} parent=5 // pred_check
        %p617 = pneg %p616
      $region70: #{tpu_custom_call.1} parent=5 // pred_check_branch
        %619 = sbr.rel (%p617) target = $region72
      $region71: #{tpu_custom_call.1} parent=5 // pred_region
        %s620 = ssub.s32 %s22, 2
        // Predicated region
        $region73: #{tpu_custom_call.1} parent=71 // pred_check
          %p621 = pneg %p203
        $region74: #{tpu_custom_call.1} parent=71 // pred_check_branch
          %623 = sbr.rel (%p621) target = $region76
        $region75: #{tpu_custom_call.1} parent=71 // pred_region
          %s624 = sand.u32 %s188, 1
          %s625 = scalar_lea.sflag [#allocation5], %s624
          %s626 = sand.u32 %s188, 1
          %s627 = smul.addr %s626, 8
          %s628 = scalar_lea.vmem [#allocation11], %s627
          %630 = dma.done %s625, 128
        $region76: #{tpu_custom_call.1} parent=71 // pred_fallthru
          _
      $region72: #{tpu_custom_call.1} parent=5 // pred_fallthru
        _
    $region6: #{tpu_custom_call.1} parent=1 // loop_footer
      %s26 = sadd.s32 1, %s22
    $region7: #{tpu_custom_call.1} parent=1 // loop_footer_branch
      %21 = sbr.rel target = $region3
    $region8: #{tpu_custom_call.1} parent=1 // loop_exit
      _
    %631 = vsyncpa [#allocation4], 1
    %s632 = scalar_lea.sflag [#allocation4], 1
    %633 = vsyncpa %s632, 1
    %634 = vsyncpa [#allocation7], 1
    %s635 = scalar_lea.sflag [#allocation7], 1
    %636 = vsyncpa %s635, 1
    %637 = vsyncpa [#allocation10], 1
    %638 = vsyncpa [#allocation5], 1
    %s639 = scalar_lea.sflag [#allocation5], 1
    %640 = vsyncpa %s639, 1

</llo_original>
